<compile_context>
chip_gen: v7x
topology: tpu7x:2x2x1
jax: 0.10.0
libtpu: 0.0.40
codegen_flags: <defaults>
</compile_context>

<pallas_src>
import functools

import jax
import jax.numpy as jnp
from jax.experimental import pallas as pl
from jax.experimental.pallas import tpu as pltpu


def _round_up(x, m):
    return ((x + m - 1) // m) * m


# ----------------------------------------------------------------------------
# Fused forward kernel (whole batch tile in one step)
# ----------------------------------------------------------------------------
def _fused_kernel(xcol_ref, wtw_ref, whc_ref, p2w_ref, v2w_ref, v3w_ref,
                  bias_ref, out_ref, *, pch):
    """Shapes (bt = batch tile, hw = H*W, lanes = bt*hw):
      xcol_ref : (kpad, bt*hw)    bf16  im2col'd input; row k9 is all-ones (bias slot)
      wtw_ref  : (cmid_p, kpad)   bf16  tower conv W^T, bias in col k9, ones-selector row
      whc_ref  : (hrows, cmid_p)  bf16  fused policy/value 1x1 conv W^T, bias in col cmid
      p2w_ref  : (pch*hw, a_pad)  bf16  policy FC weight (channel-major flatten, A padded)
      v2w_ref  : (hw, vhid)       bf16  value FC1 weight
      v3w_ref  : (vhid, a_pad)    bf16  value FC2 weight, real column at index A
      bias_ref : (8, a_pad)       f32   row0=p2_b, row1=v2_b, row2=v3_b(@col A)
      out_ref  : (bt, a_pad)      f32   cols [0,A)=policy logits, col A=value
    """
    bt = out_ref.shape[0]
    hw, vhid = v2w_ref.shape

    # Tower: 3x3 conv as ONE (cmid_p,kpad)@(kpad,bt*hw) matmul, 128-lane dense.
    # Bias rides inside the matmul via the ones row of xcol.  f32 acc + ReLU.
    t = jnp.dot(wtw_ref[...], xcol_ref[...], preferred_element_type=jnp.float32)
    t = jnp.maximum(t, 0.0)                                     # (cmid_p, bt*hw)

    # Fused policy/value 1x1 convs (bias folded the same way) + ReLU.
    hc = jnp.dot(whc_ref[...], t.astype(jnp.bfloat16),
                 preferred_element_type=jnp.float32)
    hc = jnp.maximum(hc, 0.0)                                   # (hrows, bt*hw)

    # Re-gather the (1, bt*hw) channel rows into (bt, hw) batch-major blocks
    # using only static slices + concats (no in-kernel reshape/transpose).
    def rows(c):
        return jnp.concatenate(
            [hc[c:c + 1, b * hw:(b + 1) * hw] for b in range(bt)], axis=0)

    p_flat = jnp.concatenate([rows(c) for c in range(pch)], axis=1)  # (bt, pch*hw)
    v_flat = rows(pch)                                               # (bt, hw)

    # Policy FC: single (bt, pch*hw)@(pch*hw, a_pad) matmul -> lane-dense rows.
    pol = jnp.dot(p_flat.astype(jnp.bfloat16), p2w_ref[...],
                  preferred_element_type=jnp.float32) + bias_ref[0:1, :]

    # Value head: batched FC + ReLU, FC + tanh.  v3w/v3b are pre-placed in
    # column A of the shared a_pad-wide row; every other column stays 0.
    v_hid = jnp.dot(v_flat.astype(jnp.bfloat16), v2w_ref[...],
                    preferred_element_type=jnp.float32) + bias_ref[1:2, :vhid]
    v_hid = jnp.maximum(v_hid, 0.0)                                  # (bt, vhid)
    val = jnp.tanh(jnp.dot(v_hid.astype(jnp.bfloat16), v3w_ref[...],
                           preferred_element_type=jnp.float32) + bias_ref[2:3, :])

    # One unmasked, 128-wide store per batch tile.
    out_ref[...] = (pol + val).astype(out_ref.dtype)


# ----------------------------------------------------------------------------
# One-off parameter re-layout (run once, OUTSIDE jit)
# ----------------------------------------------------------------------------
def prepare_params(params):
    kh, kw, cin, cmid = params["tw_w"].shape
    pch = params["p1_w"].shape[1]
    hw = params["p2_w"].shape[0] // pch
    a = params["p2_w"].shape[1]
    vhid = params["v2_w"].shape[1]
    k9 = kh * kw * cin

    kpad = _round_up(k9 + 1, 64)       # contraction dim (+1 = ones/bias slot)
    cmid_p = _round_up(cmid + 1, 8)    # tower channels (+1 = ones row)
    hrows = _round_up(pch + 1, 8)      # policy channels + value channel
    a_pad = _round_up(a + 1, 128)      # policy lanes + 1 column for the value

    f32 = jnp.float32

    # Tower conv W^T: bias folded into col k9; row `cmid` selects the ones row.
    wtw = jnp.zeros((cmid_p, kpad), f32)
    wtw = wtw.at[:cmid, :k9].set(params["tw_w"].reshape(k9, cmid).T)
    wtw = wtw.at[:cmid, k9].set(params["tw_b"])
    wtw = wtw.at[cmid, k9].set(1.0)

    # Fused policy/value 1x1 conv W^T: bias folded into col `cmid`.
    whc = jnp.zeros((hrows, cmid_p), f32)
    whc = whc.at[:pch, :cmid].set(params["p1_w"].T)
    whc = whc.at[:pch, cmid].set(params["p1_b"])
    whc = whc.at[pch, :cmid].set(params["v1_w"][:, 0])
    whc = whc.at[pch, cmid].set(params["v1_b"][0])

    # Policy FC weight in the kernel's channel-major flatten order (c*hw + s),
    # zero-padded from A to a_pad output lanes.
    p2w_re = params["p2_w"].reshape(hw, pch, a).transpose(1, 0, 2).reshape(pch * hw, a)
    p2w = jnp.zeros((pch * hw, a_pad), f32).at[:, :a].set(p2w_re)

    # Value FC2 weight placed in output column A.
    v3w = jnp.zeros((vhid, a_pad), f32).at[:, a].set(params["v3_w"][:, 0])

    # One (8, a_pad) f32 bias pack instead of three tiny operands.
    bias = jnp.zeros((8, a_pad), f32)
    bias = bias.at[0, :a].set(params["p2_b"])
    bias = bias.at[1, :vhid].set(params["v2_b"])
    bias = bias.at[2, a].set(params["v3_b"][0])

    return {
        "wtw": wtw.astype(jnp.bfloat16),
        "whc": whc.astype(jnp.bfloat16),
        "p2w": p2w.astype(jnp.bfloat16),
        "v2w": params["v2_w"].astype(jnp.bfloat16),
        "v3w": v3w.astype(jnp.bfloat16),
        "bias": bias,
    }


# ----------------------------------------------------------------------------
# Network forward (tower -> (policy, value)), single Pallas call
# ----------------------------------------------------------------------------
def network_forward(x, kp, *, a):
    n, cin, h, w = x.shape
    hw = h * w
    _, kpad = kp["wtw"].shape
    pch_hw, a_pad = kp["p2w"].shape
    pch = pch_hw // hw
    k9 = 9 * cin

    # Trace-time im2col, built straight from NCHW: one tiny transpose puts
    # channels on sublanes and (batch, h, w) on lanes; a ones row carries the
    # tower bias; zero rows pad K to kpad.  Lanes = n*hw (=128 for n=2, 8x8).
    xT = jnp.transpose(x, (1, 0, 2, 3)).astype(jnp.float32)          # (cin, n, h, w)
    xTp = jnp.pad(xT, ((0, 0), (0, 0), (1, 1), (1, 1)))
    pieces = [xTp[:, :, dy:dy + h, dx:dx + w].reshape(cin, n * hw)
              for dy in range(3) for dx in range(3)]
    pieces.append(jnp.ones((1, n * hw), jnp.float32))
    if kpad - k9 - 1 > 0:
        pieces.append(jnp.zeros((kpad - k9 - 1, n * hw), jnp.float32))
    xcol = jnp.concatenate(pieces, axis=0).astype(jnp.bfloat16)      # (kpad, n*hw)

    kernel = functools.partial(_fused_kernel, pch=pch)
    operands = (xcol, kp["wtw"], kp["whc"], kp["p2w"], kp["v2w"], kp["v3w"],
                kp["bias"])

    out = pl.pallas_call(
        kernel,
        out_shape=jax.ShapeDtypeStruct((n, a_pad), jnp.float32),
        # Whole batch in one lane-dense step (n*hw = 128).  For bigger batches
        # this axis becomes a "parallel" batch-tile loop (feeds both v7x TCs).
        grid=(1,),
        in_specs=[pl.BlockSpec(op.shape, lambda i: (0, 0)) for op in operands],
        out_specs=pl.BlockSpec((n, a_pad), lambda i: (0, 0)),
        compiler_params=pltpu.CompilerParams(dimension_semantics=("parallel",)),
    )(*operands)

    policy = out[:, :a]          # lane-dense block, sliced back to A logits
    value = out[:, a:a + 1]      # value sits in column A of the same block
    return policy, value


# ----------------------------------------------------------------------------
# Pure-JAX reference for validation
# ----------------------------------------------------------------------------
def network_reference(x_nchw, params):
    n, cin, h, w_ = x_nchw.shape
    hw = h * w_
    x_nhwc = jnp.transpose(x_nchw, (0, 2, 3, 1)).astype(jnp.float32)

    t = jax.lax.conv_general_dilated(
        x_nhwc, params["tw_w"], window_strides=(1, 1), padding="SAME",
        dimension_numbers=("NHWC", "HWIO", "NHWC")) + params["tw_b"]
    t = jnp.maximum(t, 0.0).reshape(n, hw, -1)

    t_rows = t.reshape(n * hw, -1)
    p = jnp.maximum(t_rows @ params["p1_w"] + params["p1_b"], 0.0)
    p_flat = p.reshape(n, -1)
    policy = p_flat @ params["p2_w"] + params["p2_b"]

    v = jnp.maximum(t_rows @ params["v1_w"] + params["v1_b"], 0.0)
    v_flat = v.reshape(n, hw)
    v_hid = jnp.maximum(v_flat @ params["v2_w"] + params["v2_b"], 0.0)
    value = jnp.tanh(v_hid @ params["v3_w"] + params["v3_b"])
    return policy, value


# ----------------------------------------------------------------------------
# Main
# ----------------------------------------------------------------------------
if __name__ == "__main__":
    # batch=2, Cin=4, board 8x8, tower width 32, policy channels 2,
    # actions 65 (H*W + 1), value hidden 32.
    N, CIN, H, W = 2, 4, 8, 8
    CMID, PCH, VHID = 32, 2, 32
    HW = H * W
    A = HW + 1

    key = jax.random.PRNGKey(0)
    ks = jax.random.split(key, 12)

    def init(k, shape, scale=0.1):
        return (scale * jax.random.normal(k, shape)).astype(jnp.float32)

    params = {
        "tw_w": init(ks[0], (3, 3, CIN, CMID)),
        "tw_b": init(ks[1], (CMID,)),
        "p1_w": init(ks[2], (CMID, PCH)),
        "p1_b": init(ks[3], (PCH,)),
        "p2_w": init(ks[4], (HW * PCH, A)),
        "p2_b": init(ks[5], (A,)),
        "v1_w": init(ks[6], (CMID, 1)),
        "v1_b": init(ks[7], (1,)),
        "v2_w": init(ks[8], (HW, VHID)),
        "v2_b": init(ks[9], (VHID,)),
        "v3_w": init(ks[10], (VHID, 1)),
        "v3_b": init(ks[11], (1,)),
    }

    x = jax.random.normal(jax.random.PRNGKey(1), (N, CIN, H, W), dtype=jnp.float32)

    kp = prepare_params(params)                       # one-off, outside jit
    forward = jax.jit(network_forward, static_argnames=("a",))

    policy_out, value_out = forward(x, kp, a=A)
    policy_out = jax.block_until_ready(policy_out)
    value_out = jax.block_until_ready(value_out)

    policy_ref, value_ref = network_reference(x, params)

    assert policy_out.shape == (N, A) and value_out.shape == (N, 1)
    # bf16 MXU inputs with f32 accumulation -> slightly looser tolerance.
    assert jnp.allclose(policy_out, policy_ref, atol=2e-2, rtol=2e-2)
    assert jnp.allclose(value_out, value_ref, atol=2e-2, rtol=2e-2)

    print("KERNEL_OK")
</pallas_src>

<mosaic_0001>
module attributes {stable_mosaic.version = 11 : i64} {
  func.func @_fused_kernel(%arg0: i32, %arg1: memref<64x128xbf16, #tpu.memory_space<vmem>>, %arg2: memref<40x64xbf16, #tpu.memory_space<vmem>>, %arg3: memref<8x40xbf16, #tpu.memory_space<vmem>>, %arg4: memref<128x128xbf16, #tpu.memory_space<vmem>>, %arg5: memref<64x32xbf16, #tpu.memory_space<vmem>>, %arg6: memref<32x128xbf16, #tpu.memory_space<vmem>>, %arg7: memref<8x128xf32, #tpu.memory_space<vmem>>, %arg8: memref<2x128xf32, #tpu.memory_space<vmem>>) attributes {dimension_semantics = [#tpu.dimension_semantics<parallel>], iteration_bounds = array<i64: 1>, scalar_prefetch = 0 : i64, scratch_operands = 0 : i64, tpu.core_type = #tpu.core_type<tc>, window_params = [{pipeline_mode = #tpu.pipeline_mode<synchronous>, transform_indices = @transform_0, window_bounds = array<i64: 64, 128>}, {pipeline_mode = #tpu.pipeline_mode<synchronous>, transform_indices = @transform_1, window_bounds = array<i64: 40, 64>}, {pipeline_mode = #tpu.pipeline_mode<synchronous>, transform_indices = @transform_2, window_bounds = array<i64: 8, 40>}, {pipeline_mode = #tpu.pipeline_mode<synchronous>, transform_indices = @transform_3, window_bounds = array<i64: 128, 128>}, {pipeline_mode = #tpu.pipeline_mode<synchronous>, transform_indices = @transform_4, window_bounds = array<i64: 64, 32>}, {pipeline_mode = #tpu.pipeline_mode<synchronous>, transform_indices = @transform_5, window_bounds = array<i64: 32, 128>}, {pipeline_mode = #tpu.pipeline_mode<synchronous>, transform_indices = @transform_6, window_bounds = array<i64: 8, 128>}, {pipeline_mode = #tpu.pipeline_mode<synchronous>, transform_indices = @transform_7, window_bounds = array<i64: 2, 128>}]} {
    %c0 = arith.constant 0 : index
    %c0_0 = arith.constant 0 : index
    %0 = vector.load %arg2[%c0, %c0_0] : memref<40x64xbf16, #tpu.memory_space<vmem>>, vector<40x64xbf16>
    %c0_1 = arith.constant 0 : index
    %c0_2 = arith.constant 0 : index
    %1 = vector.load %arg1[%c0_1, %c0_2] : memref<64x128xbf16, #tpu.memory_space<vmem>>, vector<64x128xbf16>
    %cst = arith.constant dense<0.000000e+00> : vector<40x128xf32>
    %2 = tpu.matmul %0, %1, %cst {dimension_numbers = #tpu.dot_dimension_numbers<[1], [0], [0], [1], [0, 0, 1, 1], [], []>} : vector<40x64xbf16>, vector<64x128xbf16>, vector<40x128xf32> -> vector<40x128xf32>
    %cst_3 = arith.constant 0.000000e+00 : f32
    %3 = vector.broadcast %cst_3 : f32 to vector<40x128xf32>
    %4 = arith.maximumf %2, %3 : vector<40x128xf32>
    %c0_4 = arith.constant 0 : index
    %c0_5 = arith.constant 0 : index
    %5 = vector.load %arg3[%c0_4, %c0_5] : memref<8x40xbf16, #tpu.memory_space<vmem>>, vector<8x40xbf16>
    %6 = arith.truncf %4 : vector<40x128xf32> to vector<40x128xbf16>
    %cst_6 = arith.constant dense<0.000000e+00> : vector<8x128xf32>
    %7 = tpu.matmul %5, %6, %cst_6 {dimension_numbers = #tpu.dot_dimension_numbers<[1], [0], [0], [1], [0, 0, 1, 1], [], []>} : vector<8x40xbf16>, vector<40x128xbf16>, vector<8x128xf32> -> vector<8x128xf32>
    %cst_7 = arith.constant 0.000000e+00 : f32
    %8 = vector.broadcast %cst_7 : f32 to vector<8x128xf32>
    %9 = arith.maximumf %7, %8 : vector<8x128xf32>
    %10 = vector.extract_strided_slice %9 {offsets = [0, 0], sizes = [1, 64], strides = [1, 1]} : vector<8x128xf32> to vector<1x64xf32>
    %11 = vector.extract_strided_slice %9 {offsets = [0, 64], sizes = [1, 64], strides = [1, 1]} : vector<8x128xf32> to vector<1x64xf32>
    %12 = tpu.concatenate %10, %11 in 0 : vector<1x64xf32>, vector<1x64xf32> -> vector<2x64xf32>
    %13 = vector.extract_strided_slice %9 {offsets = [1, 0], sizes = [1, 64], strides = [1, 1]} : vector<8x128xf32> to vector<1x64xf32>
    %14 = vector.extract_strided_slice %9 {offsets = [1, 64], sizes = [1, 64], strides = [1, 1]} : vector<8x128xf32> to vector<1x64xf32>
    %15 = tpu.concatenate %13, %14 in 0 : vector<1x64xf32>, vector<1x64xf32> -> vector<2x64xf32>
    %16 = tpu.concatenate %12, %15 in 1 : vector<2x64xf32>, vector<2x64xf32> -> vector<2x128xf32>
    %17 = vector.extract_strided_slice %9 {offsets = [2, 0], sizes = [1, 64], strides = [1, 1]} : vector<8x128xf32> to vector<1x64xf32>
    %18 = vector.extract_strided_slice %9 {offsets = [2, 64], sizes = [1, 64], strides = [1, 1]} : vector<8x128xf32> to vector<1x64xf32>
    %19 = tpu.concatenate %17, %18 in 0 : vector<1x64xf32>, vector<1x64xf32> -> vector<2x64xf32>
    %20 = arith.truncf %16 : vector<2x128xf32> to vector<2x128xbf16>
    %c0_8 = arith.constant 0 : index
    %c0_9 = arith.constant 0 : index
    %21 = vector.load %arg4[%c0_8, %c0_9] : memref<128x128xbf16, #tpu.memory_space<vmem>>, vector<128x128xbf16>
    %cst_10 = arith.constant dense<0.000000e+00> : vector<2x128xf32>
    %22 = tpu.matmul %20, %21, %cst_10 {dimension_numbers = #tpu.dot_dimension_numbers<[1], [0], [0], [1], [0, 0, 1, 1], [], []>} : vector<2x128xbf16>, vector<128x128xbf16>, vector<2x128xf32> -> vector<2x128xf32>
    %c0_11 = arith.constant 0 : index
    %c0_12 = arith.constant 0 : index
    %23 = vector.load %arg7[%c0_11, %c0_12] : memref<8x128xf32, #tpu.memory_space<vmem>>, vector<1x128xf32>
    %24 = vector.broadcast %23 : vector<1x128xf32> to vector<2x128xf32>
    %25 = arith.addf %22, %24 : vector<2x128xf32>
    %26 = arith.truncf %19 : vector<2x64xf32> to vector<2x64xbf16>
    %c0_13 = arith.constant 0 : index
    %c0_14 = arith.constant 0 : index
    %27 = vector.load %arg5[%c0_13, %c0_14] : memref<64x32xbf16, #tpu.memory_space<vmem>>, vector<64x32xbf16>
    %cst_15 = arith.constant dense<0.000000e+00> : vector<2x32xf32>
    %28 = tpu.matmul %26, %27, %cst_15 {dimension_numbers = #tpu.dot_dimension_numbers<[1], [0], [0], [1], [0, 0, 1, 1], [], []>} : vector<2x64xbf16>, vector<64x32xbf16>, vector<2x32xf32> -> vector<2x32xf32>
    %c1 = arith.constant 1 : index
    %c0_16 = arith.constant 0 : index
    %29 = vector.load %arg7[%c1, %c0_16] : memref<8x128xf32, #tpu.memory_space<vmem>>, vector<1x32xf32>
    %30 = vector.broadcast %29 : vector<1x32xf32> to vector<2x32xf32>
    %31 = arith.addf %28, %30 : vector<2x32xf32>
    %cst_17 = arith.constant 0.000000e+00 : f32
    %32 = vector.broadcast %cst_17 : f32 to vector<2x32xf32>
    %33 = arith.maximumf %31, %32 : vector<2x32xf32>
    %34 = arith.truncf %33 : vector<2x32xf32> to vector<2x32xbf16>
    %c0_18 = arith.constant 0 : index
    %c0_19 = arith.constant 0 : index
    %35 = vector.load %arg6[%c0_18, %c0_19] : memref<32x128xbf16, #tpu.memory_space<vmem>>, vector<32x128xbf16>
    %cst_20 = arith.constant dense<0.000000e+00> : vector<2x128xf32>
    %36 = tpu.matmul %34, %35, %cst_20 {dimension_numbers = #tpu.dot_dimension_numbers<[1], [0], [0], [1], [0, 0, 1, 1], [], []>} : vector<2x32xbf16>, vector<32x128xbf16>, vector<2x128xf32> -> vector<2x128xf32>
    %c2 = arith.constant 2 : index
    %c0_21 = arith.constant 0 : index
    %37 = vector.load %arg7[%c2, %c0_21] : memref<8x128xf32, #tpu.memory_space<vmem>>, vector<1x128xf32>
    %38 = vector.broadcast %37 : vector<1x128xf32> to vector<2x128xf32>
    %39 = arith.addf %36, %38 : vector<2x128xf32>
    %40 = math.tanh %39 : vector<2x128xf32>
    %41 = arith.addf %25, %40 : vector<2x128xf32>
    %c0_22 = arith.constant 0 : index
    %c0_23 = arith.constant 0 : index
    %42 = vector.load %arg8[%c0_22, %c0_23] : memref<2x128xf32, #tpu.memory_space<vmem>>, vector<2x128xf32>
    tpu.vector_store %arg8[%c0_22, %c0_23], %41 {strides = array<i32>} : memref<2x128xf32, #tpu.memory_space<vmem>>, vector<2x128xf32>,
    return
  }
  func.func @transform_0(%arg0: i32) -> (i32, i32) {
    %c0_i32 = arith.constant 0 : i32
    %c0_i32_0 = arith.constant 0 : i32
    %c0_i32_1 = arith.constant 0 : i32
    return %c0_i32, %c0_i32_0 : i32, i32
  }
  func.func @transform_1(%arg0: i32) -> (i32, i32) {
    %c0_i32 = arith.constant 0 : i32
    %c0_i32_0 = arith.constant 0 : i32
    %c0_i32_1 = arith.constant 0 : i32
    return %c0_i32, %c0_i32_0 : i32, i32
  }
  func.func @transform_2(%arg0: i32) -> (i32, i32) {
    %c0_i32 = arith.constant 0 : i32
    %c0_i32_0 = arith.constant 0 : i32
    %c0_i32_1 = arith.constant 0 : i32
    return %c0_i32, %c0_i32_0 : i32, i32
  }
  func.func @transform_3(%arg0: i32) -> (i32, i32) {
    %c0_i32 = arith.constant 0 : i32
    %c0_i32_0 = arith.constant 0 : i32
    %c0_i32_1 = arith.constant 0 : i32
    return %c0_i32, %c0_i32_0 : i32, i32
  }
  func.func @transform_4(%arg0: i32) -> (i32, i32) {
    %c0_i32 = arith.constant 0 : i32
    %c0_i32_0 = arith.constant 0 : i32
    %c0_i32_1 = arith.constant 0 : i32
    return %c0_i32, %c0_i32_0 : i32, i32
  }
  func.func @transform_5(%arg0: i32) -> (i32, i32) {
    %c0_i32 = arith.constant 0 : i32
    %c0_i32_0 = arith.constant 0 : i32
    %c0_i32_1 = arith.constant 0 : i32
    return %c0_i32, %c0_i32_0 : i32, i32
  }
  func.func @transform_6(%arg0: i32) -> (i32, i32) {
    %c0_i32 = arith.constant 0 : i32
    %c0_i32_0 = arith.constant 0 : i32
    %c0_i32_1 = arith.constant 0 : i32
    return %c0_i32, %c0_i32_0 : i32, i32
  }
  func.func @transform_7(%arg0: i32) -> (i32, i32) {
    %c0_i32 = arith.constant 0 : i32
    %c0_i32_0 = arith.constant 0 : i32
    %c0_i32_1 = arith.constant 0 : i32
    return %c0_i32, %c0_i32_0 : i32, i32
  }
}

</mosaic_0001>

<llo_original>
// kernel: network_forward.1
$region0: #{network_forward.1}
  #allocation0 [shape = 'u32[]', space=smem, size = 0x4, offset = 0x4, fixed_abs, tag = 'smem constant byte address 0x4 - core index']
  #allocation1 [shape = 'u32[144,128]{1,0:T(1,128)}', space=vmem, size = 0x12000, scoped, tag = 'internal scratch']
  %s0 = inlined_call_operand.vmem [shape: bf16[64,128], index: 0, kind: input, shape index: {}]
  %s1 = inlined_call_operand.vmem [shape: bf16[40,64], index: 1, kind: input, shape index: {}]
  %s2 = inlined_call_operand.vmem [shape: bf16[8,40], index: 2, kind: input, shape index: {}]
  %s3 = inlined_call_operand.vmem [shape: bf16[128,128], index: 3, kind: input, shape index: {}]
  %s4 = inlined_call_operand.vmem [shape: bf16[64,32], index: 4, kind: input, shape index: {}]
  %s5 = inlined_call_operand.vmem [shape: bf16[32,128], index: 5, kind: input, shape index: {}]
  %s6 = inlined_call_operand.vmem [shape: f32[8,128], index: 6, kind: input, shape index: {}]
  %s7 = inlined_call_operand.vmem [shape: f32[2,128], index: 7, kind: output, shape index: {}]
  %s8 = sld [smem:[#allocation0]]
  $region38: #{network_forward.1} parent=0
    _
  %s10 = ssub.s32 1, %s8
  %s11 = scalar_select 0, %s10, %s8
  // Predicated region
  $region2: #{network_forward.1} parent=0 // pred_check
    _
  $region3: #{network_forward.1} parent=0 // pred_check_branch
    %13 = sbr.rel (0) target = $region5
  $region4: #{network_forward.1} parent=0 // pred_region
    _
  $region5: #{network_forward.1} parent=0 // pred_fallthru
    _
  // Predicated region
  $region6: #{network_forward.1} parent=0 // pred_check
    _
  $region7: #{network_forward.1} parent=0 // pred_check_branch
    %15 = sbr.rel (0) target = $region9
  $region8: #{network_forward.1} parent=0 // pred_region
    _
  $region9: #{network_forward.1} parent=0 // pred_fallthru
    _
  // Predicated region
  $region10: #{network_forward.1} parent=0 // pred_check
    _
  $region11: #{network_forward.1} parent=0 // pred_check_branch
    %17 = sbr.rel (0) target = $region13
  $region12: #{network_forward.1} parent=0 // pred_region
    _
  $region13: #{network_forward.1} parent=0 // pred_fallthru
    _
  // Predicated region
  $region14: #{network_forward.1} parent=0 // pred_check
    _
  $region15: #{network_forward.1} parent=0 // pred_check_branch
    %19 = sbr.rel (0) target = $region17
  $region16: #{network_forward.1} parent=0 // pred_region
    _
  $region17: #{network_forward.1} parent=0 // pred_fallthru
    _
  // Predicated region
  $region18: #{network_forward.1} parent=0 // pred_check
    _
  $region19: #{network_forward.1} parent=0 // pred_check_branch
    %21 = sbr.rel (0) target = $region21
  $region20: #{network_forward.1} parent=0 // pred_region
    _
  $region21: #{network_forward.1} parent=0 // pred_fallthru
    _
  // Predicated region
  $region22: #{network_forward.1} parent=0 // pred_check
    _
  $region23: #{network_forward.1} parent=0 // pred_check_branch
    %23 = sbr.rel (0) target = $region25
  $region24: #{network_forward.1} parent=0 // pred_region
    _
  $region25: #{network_forward.1} parent=0 // pred_fallthru
    _
  // Predicated region
  $region26: #{network_forward.1} parent=0 // pred_check
    _
  $region27: #{network_forward.1} parent=0 // pred_check_branch
    %25 = sbr.rel (0) target = $region29
  $region28: #{network_forward.1} parent=0 // pred_region
    _
  $region29: #{network_forward.1} parent=0 // pred_fallthru
    _
  %v27 = vld [vmem:[%s1] sm:$0xf]
  %v28 = vld [vmem:[%s1 + $0x4] sm:$0xf]
  %v29 = vld [vmem:[%s1 + $0x8] sm:$0xf]
  %v30 = vld [vmem:[%s1 + $0xc] sm:$0xf]
  %v31 = vld [vmem:[%s1 + $0x10] sm:$0xf]
  %v32 = vld [vmem:[%s0] sm:$0xf]
  %v33 = vld [vmem:[%s0 + $0x4] sm:$0xf]
  %v34 = vld [vmem:[%s0 + $0x8] sm:$0xf]
  %v35 = vld [vmem:[%s0 + $0xc] sm:$0xf]
  %v36 = vld [vmem:[%s0 + $0x10] sm:$0xf]
  %v37 = vld [vmem:[%s0 + $0x14] sm:$0xf]
  %v38 = vld [vmem:[%s0 + $0x18] sm:$0xf]
  %v39 = vld [vmem:[%s0 + $0x1c] sm:$0xf]
  %v45 = vunpack.c.l.b16 %v27
  %v46 = vunpack.c.l.b16 %v28
  %v47 = vunpack.c.l.b16 %v29
  %v48 = vunpack.c.l.b16 %v30
  %v49 = vunpack.c.l.b16 %v31
  %v50 = vpack.c.b16 %v46, %v45
  %v51 = vpack.c.b16 %v48, %v47
  %v52 = vpack.c.b16 %v49, %v49
  %v61 = vunpack.c.l.b16 %v32
  %v62 = vunpack.c.l.b16 %v33
  %v63 = vunpack.c.l.b16 %v34
  %v64 = vunpack.c.l.b16 %v35
  %v65 = vunpack.c.l.b16 %v36
  %v66 = vunpack.c.l.b16 %v37
  %v67 = vunpack.c.l.b16 %v38
  %v68 = vunpack.c.l.b16 %v39
  %v69 = vpack.c.b16 %v62, %v61
  %v70 = vpack.c.b16 %v64, %v63
  %v71 = vpack.c.b16 %v66, %v65
  %v72 = vpack.c.b16 %v68, %v67
  %vm77 = vcmask 523264
  %v79 = vsel %vm77, %v50, 0
  %v82 = vsel %vm77, %v51, 0
  %v85 = vsel %vm77, %v52, 0
  %87 = vmatprep.subr.bf16.mxu0 0
  %88 = vmatpush1.bf16.msra.mxu0 %v69
  %89 = vmatprep.subr.bf16.mxu0 0
  %90 = vmatpush1.bf16.msra.mxu0 %v70
  %91 = vmatprep.subr.bf16.mxu0 0
  %92 = vmatpush1.bf16.msra.mxu0 %v71
  %93 = vmatprep.subr.bf16.mxu0 0
  %94 = vmatpush1.bf16.msra.mxu0 %v72
  %95 = vmatprep.subr.bf16.mxu0 0
  %96 = vmatpush1.bf16.msra.mxu0 0
  %97 = vmatprep.subr.bf16.mxu0 0
  %98 = vmatpush1.bf16.msra.mxu0 0
  %99 = vmatprep.subr.bf16.mxu0 0
  %100 = vmatpush1.bf16.msra.mxu0 0
  %101 = vmatprep.subr.bf16.mxu0 0
  %102 = vmatpush1.bf16.msra.mxu0 0
  %103 = vmatprep.subr.bf16.mxu0 0
  %104 = vmatpush1.bf16.msra.mxu0 0
  %105 = vmatprep.subr.bf16.mxu0 0
  %106 = vmatpush1.bf16.msra.mxu0 0
  %107 = vmatprep.subr.bf16.mxu0 0
  %108 = vmatpush1.bf16.msra.mxu0 0
  %109 = vmatprep.subr.bf16.mxu0 0
  %110 = vmatpush1.bf16.msra.mxu0 0
  %111 = vmatprep.subr.bf16.mxu0 0
  %112 = vmatpush1.bf16.msra.mxu0 0
  %113 = vmatprep.subr.bf16.mxu0 0
  %114 = vmatpush1.bf16.msra.mxu0 0
  %115 = vmatprep.subr.bf16.mxu0 0
  %116 = vmatpush1.bf16.msra.mxu0 0
  %117 = vmatprep.subr.bf16.mxu0 0
  %118 = vmatpush1.bf16.msra.mxu0 0
  %119 = vmatprep.mubr.bf16.mxu0 0
  %120 = vmatmul.mubr.bf16.gmra.mrb[0].mxu0 %v79
  %v121 = vpop.f32.mrb[0].mxu0
  %v122 = vadd.f32 0.0, %v121
  %v123 = vpop.f32.mrb[0].mxu0
  %v124 = vpop.f32.mrb[0].mxu0
  %v125 = vadd.f32 0.0, %v124
  %v126 = vpop.f32.mrb[0].mxu0
  %127 = vmatprep.mubr.bf16.mxu0 0
  %128 = vmatmul.mubr.bf16.gmra.mrb[0].mxu0 %v82
  %v129 = vpop.f32.mrb[0].mxu0
  %v130 = vadd.f32 0.0, %v129
  %v131 = vpop.f32.mrb[0].mxu0
  %v132 = vpop.f32.mrb[0].mxu0
  %v133 = vadd.f32 0.0, %v132
  %v134 = vpop.f32.mrb[0].mxu0
  %135 = vmatprep.mubr.bf16.mxu0 0
  %136 = vmatmul.mubr.bf16.gmra.mrb[0].mxu0 %v85
  %v137 = vpop.f32.mrb[0].mxu0
  %v138 = vadd.f32 0.0, %v137
  %v139 = vpop.f32.mrb[0].mxu0
  %v140 = vpop.f32.mrb[0].mxu0
  %v141 = vpop.f32.mrb[0].mxu0
  %142 = vdwg.mxu0
  %v143 = vmax.f32 %v122, 0.0
  %v144 = vmax.f32 %v125, 0.0
  %v145 = vmax.f32 %v130, 0.0
  %v146 = vmax.f32 %v133, 0.0
  %v147 = vmax.f32 %v138, 0.0
  %v148 = vld [vmem:[%s2] sm:$0xf]
  %v149 = vpack.c.bf16 %v144, %v143
  %v150 = vpack.c.bf16 %v146, %v145
  %v151 = vpack.c.bf16 %v147, %v147
  %vm152 = vcmask 326656
  %v154 = vsel %vm152, %v148, 0
  %vm156 = vcmask 1043456
  %v158 = vsel %vm156, %v151, 0
  %160 = vmatprep.subr.bf16.mxu0 0
  %161 = vmatpush1.bf16.msra.mxu0 %v149
  %162 = vmatprep.subr.bf16.mxu0 0
  %163 = vmatpush1.bf16.msra.mxu0 %v150
  %164 = vmatprep.subr.bf16.mxu0 0
  %165 = vmatpush1.bf16.msra.mxu0 %v158
  %166 = vmatprep.subr.bf16.mxu0 0
  %167 = vmatpush1.bf16.msra.mxu0 0
  %168 = vmatprep.subr.bf16.mxu0 0
  %169 = vmatpush1.bf16.msra.mxu0 0
  %170 = vmatprep.subr.bf16.mxu0 0
  %171 = vmatpush1.bf16.msra.mxu0 0
  %172 = vmatprep.subr.bf16.mxu0 0
  %173 = vmatpush1.bf16.msra.mxu0 0
  %174 = vmatprep.subr.bf16.mxu0 0
  %175 = vmatpush1.bf16.msra.mxu0 0
  %176 = vmatprep.subr.bf16.mxu0 0
  %177 = vmatpush1.bf16.msra.mxu0 0
  %178 = vmatprep.subr.bf16.mxu0 0
  %179 = vmatpush1.bf16.msra.mxu0 0
  %180 = vmatprep.subr.bf16.mxu0 0
  %181 = vmatpush1.bf16.msra.mxu0 0
  %182 = vmatprep.subr.bf16.mxu0 0
  %183 = vmatpush1.bf16.msra.mxu0 0
  %184 = vmatprep.subr.bf16.mxu0 0
  %185 = vmatpush1.bf16.msra.mxu0 0
  %186 = vmatprep.subr.bf16.mxu0 0
  %187 = vmatpush1.bf16.msra.mxu0 0
  %188 = vmatprep.subr.bf16.mxu0 0
  %189 = vmatpush1.bf16.msra.mxu0 0
  %190 = vmatprep.subr.bf16.mxu0 0
  %191 = vmatpush1.bf16.msra.mxu0 0
  %192 = vmatprep.mubr.bf16.mxu0 0
  %193 = vmatmul.mubr.bf16.gmra.mrb[0].mxu0 %v154
  %v194 = vpop.f32.mrb[0].mxu0
  %v195 = vadd.f32 0.0, %v194
  %v196 = vpop.f32.mrb[0].mxu0
  %v197 = vpop.f32.mrb[0].mxu0
  %v198 = vpop.f32.mrb[0].mxu0
  %199 = vdwg.mxu0
  %v200 = vmax.f32 %v195, 0.0
  %v202 = vrot.slane %v200, 7
  %203 = vrot.lane.b32.xlu0 %v202, 64
  %v204 = vpop.permute.xlu0 %203
  %vm206 = vcmask 1040384
  %v207 = vsel %vm206, %v200, %v204
  %v208 = vrot.slane %v200, 1
  %210 = vrot.lane.b32.xlu0 %v200, 64
  %v211 = vpop.permute.xlu0 %210
  %v213 = vsel %vm206, %v208, %v211
  %215 = vrot.lane.b32.xlu0 %v213, 64
  %v216 = vpop.permute.xlu0 %215
  %v218 = vsel %vm77, %v207, %v216
  %v219 = vrot.slane %v200, 2
  %221 = vrot.lane.b32.xlu0 %v208, 64
  %v222 = vpop.permute.xlu0 %221
  %v224 = vsel %vm206, %v219, %v222
  %v225 = vpack.c.bf16 %v218, %v218
  %v226 = vld [vmem:[%s3] sm:$0xf]
  %v227 = vld [vmem:[%s3 + $0x4] sm:$0xf]
  %v228 = vld [vmem:[%s3 + $0x8] sm:$0xf]
  %v229 = vld [vmem:[%s3 + $0xc] sm:$0xf]
  %v230 = vld [vmem:[%s3 + $0x10] sm:$0xf]
  %v231 = vld [vmem:[%s3 + $0x14] sm:$0xf]
  %v232 = vld [vmem:[%s3 + $0x18] sm:$0xf]
  %v233 = vld [vmem:[%s3 + $0x1c] sm:$0xf]
  %v234 = vld [vmem:[%s3 + $0x20] sm:$0xf]
  %v235 = vld [vmem:[%s3 + $0x24] sm:$0xf]
  %v236 = vld [vmem:[%s3 + $0x28] sm:$0xf]
  %v237 = vld [vmem:[%s3 + $0x2c] sm:$0xf]
  %v238 = vld [vmem:[%s3 + $0x30] sm:$0xf]
  %v239 = vld [vmem:[%s3 + $0x34] sm:$0xf]
  %v240 = vld [vmem:[%s3 + $0x38] sm:$0xf]
  %v241 = vld [vmem:[%s3 + $0x3c] sm:$0xf]
  %v242 = vld [vmem:[%s6] sm:$0x1]
  %v243 = vlaneseq
  %v244 = vshrl.u32 %v243, 7
  %v245 = vsub.s32 0, %v244
  %v246 = vrot.slane %v242, %v245
  %v263 = vunpack.c.l.b16 %v226
  %v264 = vunpack.c.l.b16 %v227
  %v265 = vunpack.c.l.b16 %v228
  %v266 = vunpack.c.l.b16 %v229
  %v267 = vunpack.c.l.b16 %v230
  %v268 = vunpack.c.l.b16 %v231
  %v269 = vunpack.c.l.b16 %v232
  %v270 = vunpack.c.l.b16 %v233
  %v271 = vunpack.c.l.b16 %v234
  %v272 = vunpack.c.l.b16 %v235
  %v273 = vunpack.c.l.b16 %v236
  %v274 = vunpack.c.l.b16 %v237
  %v275 = vunpack.c.l.b16 %v238
  %v276 = vunpack.c.l.b16 %v239
  %v277 = vunpack.c.l.b16 %v240
  %v278 = vunpack.c.l.b16 %v241
  %v279 = vpack.c.b16 %v264, %v263
  %v280 = vpack.c.b16 %v266, %v265
  %v281 = vpack.c.b16 %v268, %v267
  %v282 = vpack.c.b16 %v270, %v269
  %v283 = vpack.c.b16 %v272, %v271
  %v284 = vpack.c.b16 %v274, %v273
  %v285 = vpack.c.b16 %v276, %v275
  %v286 = vpack.c.b16 %v278, %v277
  %295 = vmatprep.subr.bf16.mxu0 0
  %296 = vmatpush1.bf16.msra.mxu0 %v279
  %297 = vmatprep.subr.bf16.mxu0 0
  %298 = vmatpush1.bf16.msra.mxu0 %v280
  %299 = vmatprep.subr.bf16.mxu0 0
  %300 = vmatpush1.bf16.msra.mxu0 %v281
  %301 = vmatprep.subr.bf16.mxu0 0
  %302 = vmatpush1.bf16.msra.mxu0 %v282
  %303 = vmatprep.subr.bf16.mxu0 0
  %304 = vmatpush1.bf16.msra.mxu0 %v283
  %305 = vmatprep.subr.bf16.mxu0 0
  %306 = vmatpush1.bf16.msra.mxu0 %v284
  %307 = vmatprep.subr.bf16.mxu0 0
  %308 = vmatpush1.bf16.msra.mxu0 %v285
  %309 = vmatprep.subr.bf16.mxu0 0
  %310 = vmatpush1.bf16.msra.mxu0 %v286
  %311 = vmatprep.subr.bf16.mxu0 0
  %312 = vmatpush1.bf16.msra.mxu0 0
  %313 = vmatprep.subr.bf16.mxu0 0
  %314 = vmatpush1.bf16.msra.mxu0 0
  %315 = vmatprep.subr.bf16.mxu0 0
  %316 = vmatpush1.bf16.msra.mxu0 0
  %317 = vmatprep.subr.bf16.mxu0 0
  %318 = vmatpush1.bf16.msra.mxu0 0
  %319 = vmatprep.subr.bf16.mxu0 0
  %320 = vmatpush1.bf16.msra.mxu0 0
  %321 = vmatprep.subr.bf16.mxu0 0
  %322 = vmatpush1.bf16.msra.mxu0 0
  %323 = vmatprep.subr.bf16.mxu0 0
  %324 = vmatpush1.bf16.msra.mxu0 0
  %325 = vmatprep.subr.bf16.mxu0 0
  %326 = vmatpush1.bf16.msra.mxu0 0
  %327 = vmatprep.mubr.bf16.mxu0 0
  %328 = vmatmul.mubr.bf16.gmra.mrb[0].mxu0 %v225
  %v329 = vpop.f32.mrb[0].mxu0
  %v330 = vadd.f32 %v246, %v329
  %v331 = vpop.f32.mrb[0].mxu0
  %v332 = vpop.f32.mrb[0].mxu0
  %v333 = vpop.f32.mrb[0].mxu0
  %334 = vdwg.mxu0
  %v335 = vpack.c.bf16 %v224, %v224
  %v336 = vld [vmem:[%s4] sm:$0xf]
  %v337 = vld [vmem:[%s4 + $0x4] sm:$0xf]
  %v338 = vld [vmem:[%s4 + $0x8] sm:$0xf]
  %v339 = vld [vmem:[%s4 + $0xc] sm:$0xf]
  %v340 = vld [vmem:[%s4 + $0x10] sm:$0xf]
  %v341 = vld [vmem:[%s4 + $0x14] sm:$0xf]
  %v342 = vld [vmem:[%s4 + $0x18] sm:$0xf]
  %v343 = vld [vmem:[%s4 + $0x1c] sm:$0xf]
  %v344 = vld [vmem:[%s6 + $0x1] sm:$0x1]
  %v345 = vlaneseq
  %v346 = vshrl.u32 %v345, 7
  %v347 = vsub.s32 0, %v346
  %v348 = vrot.slane %v344, %v347
  %v357 = vunpack.c.l.b16 %v336
  %v358 = vunpack.c.l.b16 %v337
  %v359 = vunpack.c.l.b16 %v338
  %v360 = vunpack.c.l.b16 %v339
  %v361 = vunpack.c.l.b16 %v340
  %v362 = vunpack.c.l.b16 %v341
  %v363 = vunpack.c.l.b16 %v342
  %v364 = vunpack.c.l.b16 %v343
  %v365 = vpack.c.b16 %v358, %v357
  %v366 = vpack.c.b16 %v360, %v359
  %v367 = vpack.c.b16 %v362, %v361
  %v368 = vpack.c.b16 %v364, %v363
  %v374 = vsel %vm77, %v335, 0
  %376 = vmatprep.subr.bf16.mxu0 0
  %377 = vmatpush1.bf16.msra.mxu0 %v365
  %378 = vmatprep.subr.bf16.mxu0 0
  %379 = vmatpush1.bf16.msra.mxu0 %v366
  %380 = vmatprep.subr.bf16.mxu0 0
  %381 = vmatpush1.bf16.msra.mxu0 %v367
  %382 = vmatprep.subr.bf16.mxu0 0
  %383 = vmatpush1.bf16.msra.mxu0 %v368
  %384 = vmatprep.subr.bf16.mxu0 0
  %385 = vmatpush1.bf16.msra.mxu0 0
  %386 = vmatprep.subr.bf16.mxu0 0
  %387 = vmatpush1.bf16.msra.mxu0 0
  %388 = vmatprep.subr.bf16.mxu0 0
  %389 = vmatpush1.bf16.msra.mxu0 0
  %390 = vmatprep.subr.bf16.mxu0 0
  %391 = vmatpush1.bf16.msra.mxu0 0
  %392 = vmatprep.subr.bf16.mxu0 0
  %393 = vmatpush1.bf16.msra.mxu0 0
  %394 = vmatprep.subr.bf16.mxu0 0
  %395 = vmatpush1.bf16.msra.mxu0 0
  %396 = vmatprep.subr.bf16.mxu0 0
  %397 = vmatpush1.bf16.msra.mxu0 0
  %398 = vmatprep.subr.bf16.mxu0 0
  %399 = vmatpush1.bf16.msra.mxu0 0
  %400 = vmatprep.subr.bf16.mxu0 0
  %401 = vmatpush1.bf16.msra.mxu0 0
  %402 = vmatprep.subr.bf16.mxu0 0
  %403 = vmatpush1.bf16.msra.mxu0 0
  %404 = vmatprep.subr.bf16.mxu0 0
  %405 = vmatpush1.bf16.msra.mxu0 0
  %406 = vmatprep.subr.bf16.mxu0 0
  %407 = vmatpush1.bf16.msra.mxu0 0
  %408 = vmatprep.mubr.bf16.mxu0 0
  %409 = vmatmul.mubr.bf16.gmra.mrb[0].mxu0 %v374
  %v410 = vpop.f32.mrb[0].mxu0
  %v411 = vadd.f32 %v348, %v410
  %v412 = vpop.f32.mrb[0].mxu0
  %v413 = vpop.f32.mrb[0].mxu0
  %v414 = vpop.f32.mrb[0].mxu0
  %415 = vdwg.mxu0
  %v416 = vmax.f32 %v411, 0.0
  %v417 = vpack.c.bf16 %v416, %v416
  %v418 = vld [vmem:[%s5] sm:$0xf]
  %v419 = vld [vmem:[%s5 + $0x4] sm:$0xf]
  %v420 = vld [vmem:[%s5 + $0x8] sm:$0xf]
  %v421 = vld [vmem:[%s5 + $0xc] sm:$0xf]
  %v422 = vld [vmem:[%s6 + $0x2] sm:$0x1]
  %v423 = vlaneseq
  %v424 = vshrl.u32 %v423, 7
  %v425 = vsub.s32 0, %v424
  %v426 = vrot.slane %v422, %v425
  %v431 = vunpack.c.l.b16 %v418
  %v432 = vunpack.c.l.b16 %v419
  %v433 = vunpack.c.l.b16 %v420
  %v434 = vunpack.c.l.b16 %v421
  %v435 = vpack.c.b16 %v432, %v431
  %v436 = vpack.c.b16 %v434, %v433
  %vm439 = vcmask 261120
  %v441 = vsel %vm439, %v417, 0
  %443 = vmatprep.subr.bf16.mxu0 0
  %444 = vmatpush1.bf16.msra.mxu0 %v435
  %445 = vmatprep.subr.bf16.mxu0 0
  %446 = vmatpush1.bf16.msra.mxu0 %v436
  %447 = vmatprep.subr.bf16.mxu0 0
  %448 = vmatpush1.bf16.msra.mxu0 0
  %449 = vmatprep.subr.bf16.mxu0 0
  %450 = vmatpush1.bf16.msra.mxu0 0
  %451 = vmatprep.subr.bf16.mxu0 0
  %452 = vmatpush1.bf16.msra.mxu0 0
  %453 = vmatprep.subr.bf16.mxu0 0
  %454 = vmatpush1.bf16.msra.mxu0 0
  %455 = vmatprep.subr.bf16.mxu0 0
  %456 = vmatpush1.bf16.msra.mxu0 0
  %457 = vmatprep.subr.bf16.mxu0 0
  %458 = vmatpush1.bf16.msra.mxu0 0
  %459 = vmatprep.subr.bf16.mxu0 0
  %460 = vmatpush1.bf16.msra.mxu0 0
  %461 = vmatprep.subr.bf16.mxu0 0
  %462 = vmatpush1.bf16.msra.mxu0 0
  %463 = vmatprep.subr.bf16.mxu0 0
  %464 = vmatpush1.bf16.msra.mxu0 0
  %465 = vmatprep.subr.bf16.mxu0 0
  %466 = vmatpush1.bf16.msra.mxu0 0
  %467 = vmatprep.subr.bf16.mxu0 0
  %468 = vmatpush1.bf16.msra.mxu0 0
  %469 = vmatprep.subr.bf16.mxu0 0
  %470 = vmatpush1.bf16.msra.mxu0 0
  %471 = vmatprep.subr.bf16.mxu0 0
  %472 = vmatpush1.bf16.msra.mxu0 0
  %473 = vmatprep.subr.bf16.mxu0 0
  %474 = vmatpush1.bf16.msra.mxu0 0
  %475 = vmatprep.mubr.bf16.mxu0 0
  %476 = vmatmul.mubr.bf16.gmra.mrb[0].mxu0 %v441
  %v477 = vpop.f32.mrb[0].mxu0
  %v478 = vadd.f32 %v426, %v477
  %v479 = vpop.f32.mrb[0].mxu0
  %v480 = vpop.f32.mrb[0].mxu0
  %v481 = vpop.f32.mrb[0].mxu0
  %482 = vdwg.mxu0
  %v483 = vtanh.pop %v478
  %v484 = vadd.f32 %v330, %v483
  %485 = vst [vmem:[%s7] sm:$0x3] %v484
  // Predicated region
  $region30: #{network_forward.1} parent=0 // pred_check
    _
  $region31: #{network_forward.1} parent=0 // pred_check_branch
    %487 = sbr.rel (0) target = $region33
  $region32: #{network_forward.1} parent=0 // pred_region
    _
  $region33: #{network_forward.1} parent=0 // pred_fallthru
    _
  // Predicated region
  $region34: #{network_forward.1} parent=0 // pred_check
    _
  $region35: #{network_forward.1} parent=0 // pred_check_branch
    %489 = sbr.rel (0) target = $region37
  $region36: #{network_forward.1} parent=0 // pred_region
    _
  $region37: #{network_forward.1} parent=0 // pred_fallthru
    _

</llo_original>
